<compile_context>
chip_gen: v7x
topology: tpu7x:2x2x1
jax: 0.10.0
libtpu: 0.0.40
codegen_flags: <defaults>
</compile_context>

<pallas_src>
import functools

import jax
import jax.numpy as jnp
from jax import lax
from jax.experimental import pallas as pl
from jax.experimental.pallas import tpu as pltpu


def _layernorm_kernel(x_ref, wb_ref, o_ref, *, eps):
    # x_ref: (block_rows, H) in native dtype.
    # wb_ref: (2, H) f32 resident block; row 0 = weight, row 1 = bias.
    x = x_ref[...].astype(jnp.float32)
    w = wb_ref[0:1, :]
    b = wb_ref[1:2, :]

    # Two-pass mean/variance for numerical parity with layer_norm_fn.
    mean = jnp.mean(x, axis=-1, keepdims=True)
    xc = x - mean
    var = jnp.mean(xc * xc, axis=-1, keepdims=True)
    inv = lax.rsqrt(var + eps)

    o_ref[...] = (xc * inv * w + b).astype(o_ref.dtype)


def layer_norm_pallas(x, weight, bias, eps=1e-6, *,
                      vmem_limit_bytes=32 * 1024 * 1024,
                      target_in_tile_bytes=3 * 1024 * 1024,
                      vmem_working_set_bytes=16 * 1024 * 1024,
                      max_block_rows=2048):
    """LayerNorm over the last dim of x; returns same shape/dtype as x."""
    orig_shape = x.shape
    H = orig_shape[-1]
    x2 = x.reshape(-1, H)
    N = x2.shape[0]

    io_bytes = jnp.dtype(x.dtype).itemsize
    # Honest working set per tile row:
    #   2x double-buffered input + 2x double-buffered output (native dtype)
    #   + ~3 f32 full-tile temporaries (upcast x, centered xc, result y).
    per_row_ws = H * (4 * io_bytes + 12)
    per_row_in = H * io_bytes

    block_rows = min(
        max_block_rows,
        max(1, target_in_tile_bytes // per_row_in),
        max(1, vmem_working_set_bytes // per_row_ws),
    )
    # Keep >= ~8 grid steps so v7x's two TensorCores both get work and the
    # DMA pipeline has compute to overlap (no-op for tiny N via the max(8,.)).
    n8 = ((N + 7) // 8) * 8
    block_rows = min(block_rows, max(8, ((n8 // 8) // 8) * 8))
    block_rows = max(8, (block_rows // 8) * 8)   # sublane-aligned
    block_rows = min(block_rows, n8)

    # Ragged last tile is handled by Pallas partial-block semantics (row-wise
    # independent op; out-of-range output rows are never written back).
    grid = (pl.cdiv(N, block_rows),)

    # Pack weight+bias into one resident f32 block (single constant-index DMA).
    wb = jnp.stack([weight.astype(jnp.float32), bias.astype(jnp.float32)], axis=0)

    out = pl.pallas_call(
        functools.partial(_layernorm_kernel, eps=float(eps)),
        out_shape=jax.ShapeDtypeStruct((N, H), x.dtype),
        grid_spec=pltpu.PrefetchScalarGridSpec(
            num_scalar_prefetch=0,
            grid=grid,
            in_specs=[
                pl.BlockSpec((block_rows, H), lambda i: (i, 0)),
                pl.BlockSpec((2, H), lambda i: (0, 0)),
            ],
            out_specs=pl.BlockSpec((block_rows, H), lambda i: (i, 0)),
        ),
        compiler_params=pltpu.CompilerParams(
            dimension_semantics=("parallel",),
            vmem_limit_bytes=vmem_limit_bytes,
        ),
    )(x2, wb)

    return out.reshape(orig_shape)


if __name__ == "__main__":
    # Small shapes consistent with the module: batch=2, seq=8, hidden=32.
    batch, seq, hidden = 2, 8, 32
    eps = 1e-6  # module's variance_epsilon is passed straight through

    key = jax.random.PRNGKey(0)
    kx, kb = jax.random.split(key)

    # Parameter init as in __init__: weight = ones(hidden), bias = randn(hidden).
    weight = jnp.ones((hidden,), dtype=jnp.float32)
    bias = jax.random.normal(kb, (hidden,), dtype=jnp.float32)

    x = jax.random.normal(kx, (batch, seq, hidden), dtype=jnp.float32)

    y = layer_norm_pallas(x, weight, bias, eps=eps)
    y = jax.block_until_ready(y)

    # Reference check (plain JAX).
    mean = jnp.mean(x, axis=-1, keepdims=True)
    var = jnp.mean((x - mean) ** 2, axis=-1, keepdims=True)
    ref = (x - mean) * jax.lax.rsqrt(var + eps) * weight + bias
    assert jnp.allclose(y, ref, atol=1e-5, rtol=1e-5), "mismatch vs reference"

    print("KERNEL_OK")
</pallas_src>

<mosaic_0001>
module attributes {stable_mosaic.version = 11 : i64} {
  func.func @_layernorm_kernel(%arg0: i32, %arg1: memref<8x32xf32, #tpu.memory_space<vmem>>, %arg2: memref<2x32xf32, #tpu.memory_space<vmem>>, %arg3: memref<8x32xf32, #tpu.memory_space<vmem>>) attributes {dimension_semantics = [#tpu.dimension_semantics<parallel>], iteration_bounds = array<i64: 2>, scalar_prefetch = 0 : i64, scratch_operands = 0 : i64, tpu.core_type = #tpu.core_type<tc>, window_params = [{transform_indices = @transform_0, window_bounds = array<i64: 8, 32>}, {pipeline_mode = #tpu.pipeline_mode<synchronous>, transform_indices = @transform_1, window_bounds = array<i64: 2, 32>}, {transform_indices = @transform_2, window_bounds = array<i64: 8, 32>}]} {
    %c0 = arith.constant 0 : index
    %c0_0 = arith.constant 0 : index
    %0 = vector.load %arg1[%c0, %c0_0] : memref<8x32xf32, #tpu.memory_space<vmem>>, vector<8x32xf32>
    %c0_1 = arith.constant 0 : index
    %c0_2 = arith.constant 0 : index
    %1 = vector.load %arg2[%c0_1, %c0_2] : memref<2x32xf32, #tpu.memory_space<vmem>>, vector<1x32xf32>
    %c1 = arith.constant 1 : index
    %c0_3 = arith.constant 0 : index
    %2 = vector.load %arg2[%c1, %c0_3] : memref<2x32xf32, #tpu.memory_space<vmem>>, vector<1x32xf32>
    %cst = arith.constant dense<0.000000e+00> : vector<8xf32>
    %3 = vector.multi_reduction <add>, %0, %cst [1] : vector<8x32xf32> to vector<8xf32>
    %4 = vector.shape_cast %3 : vector<8xf32> to vector<8x1xf32>
    %cst_4 = arith.constant 3.200000e+01 : f32
    %5 = vector.broadcast %cst_4 : f32 to vector<8x1xf32>
    %6 = arith.divf %4, %5 : vector<8x1xf32>
    %7 = vector.broadcast %6 : vector<8x1xf32> to vector<8x32xf32>
    %8 = arith.subf %0, %7 : vector<8x32xf32>
    %9 = arith.mulf %8, %8 : vector<8x32xf32>
    %cst_5 = arith.constant dense<0.000000e+00> : vector<8xf32>
    %10 = vector.multi_reduction <add>, %9, %cst_5 [1] : vector<8x32xf32> to vector<8xf32>
    %11 = vector.shape_cast %10 : vector<8xf32> to vector<8x1xf32>
    %cst_6 = arith.constant 3.200000e+01 : f32
    %12 = vector.broadcast %cst_6 : f32 to vector<8x1xf32>
    %13 = arith.divf %11, %12 : vector<8x1xf32>
    %cst_7 = arith.constant 9.99999997E-7 : f32
    %14 = vector.broadcast %cst_7 : f32 to vector<8x1xf32>
    %15 = arith.addf %13, %14 : vector<8x1xf32>
    %16 = math.rsqrt %15 : vector<8x1xf32>
    %17 = vector.broadcast %16 : vector<8x1xf32> to vector<8x32xf32>
    %18 = arith.mulf %8, %17 : vector<8x32xf32>
    %19 = vector.broadcast %1 : vector<1x32xf32> to vector<8x32xf32>
    %20 = arith.mulf %18, %19 : vector<8x32xf32>
    %21 = vector.broadcast %2 : vector<1x32xf32> to vector<8x32xf32>
    %22 = arith.addf %20, %21 : vector<8x32xf32>
    %c0_8 = arith.constant 0 : index
    %c0_9 = arith.constant 0 : index
    %23 = vector.load %arg3[%c0_8, %c0_9] : memref<8x32xf32, #tpu.memory_space<vmem>>, vector<8x32xf32>
    tpu.vector_store %arg3[%c0_8, %c0_9], %22 {strides = array<i32>} : memref<8x32xf32, #tpu.memory_space<vmem>>, vector<8x32xf32>,
    return
  }
  func.func @transform_0(%arg0: i32) -> (i32, i32) {
    %c0_i32 = arith.constant 0 : i32
    %c0_i32_0 = arith.constant 0 : i32
    return %arg0, %c0_i32 : i32, i32
  }
  func.func @transform_1(%arg0: i32) -> (i32, i32) {
    %c0_i32 = arith.constant 0 : i32
    %c0_i32_0 = arith.constant 0 : i32
    %c0_i32_1 = arith.constant 0 : i32
    return %c0_i32, %c0_i32_0 : i32, i32
  }
  func.func @transform_2(%arg0: i32) -> (i32, i32) {
    %c0_i32 = arith.constant 0 : i32
    %c0_i32_0 = arith.constant 0 : i32
    return %arg0, %c0_i32 : i32, i32
  }
}

</mosaic_0001>

<llo_original>
// kernel: tpu_custom_call.1
$region0: #{tpu_custom_call.1}
  #allocation0 [shape = 'u32[]', space=smem, size = 0x4, offset = 0x4, fixed_abs, tag = 'smem constant byte address 0x4 - core index']
  #allocation1 [shape = 'u32[144,128]{1,0:T(1,128)}', space=vmem, size = 0x12000, scoped, tag = 'internal scratch']
  %s0 = inlined_call_operand.hbm [shape: f32[16,32], index: 0, kind: input, shape index: {}]
  %s1 = inlined_call_operand.vmem [shape: f32[2,32], index: 1, kind: input, shape index: {}]
  %s2 = inlined_call_operand.hbm [shape: f32[16,32], index: 2, kind: output, shape index: {}]
  %s3 = sld [smem:[#allocation0]]
  $region45: #{tpu_custom_call.1} parent=0
    _
  %s5 = ssub.s32 1, %s3
  %s6 = scalar_select 0, %s5, %s3
  $region1: #{tpu_custom_call.1} parent=0
    #allocation2 [shape = 'u8[8192]{0}', space=vmem, size = 0x2000, scoped, tag = 'input window, operand 0']
    #allocation3 [shape = 's32[2]{0}', space=sflag, size = 0x8, scoped, tag = 'scoped memory for tpu_custom_call.1']
    #allocation4 [shape = 's32[2]{0}', space=sflag, size = 0x8, scoped, tag = 'scoped memory for tpu_custom_call.1']
    #allocation5 [shape = 'u8[8192]{0}', space=vmem, size = 0x2000, scoped, tag = 'output window, operand 0']
    %7 = vsyncpa [#allocation3], 0
    %s8 = scalar_lea.sflag [#allocation3], 1
    %9 = vsyncpa %s8, 0
    %10 = vsyncpa [#allocation4], 0
    %s11 = scalar_lea.sflag [#allocation4], 1
    %12 = vsyncpa %s11, 0
    loop: start=0, step=1, limit=4
    $region2: #{tpu_custom_call.1} parent=1 // loop_pre_header
      _
    $region3: #{tpu_custom_call.1} parent=1 // loop_header
      %s14 = sphi 0, %s18
      %p15 = scmp.ge.s32.totalorder %s14, 4
      %s24 = sphi 0, %s26
      %s27 = sphi 0, %s24
      %s28 = sphi 0, %s27
      %s44 = sphi 0, %s28
      %s48 = sphi 0, %s48
      %s50 = sphi 0, %s48
      %s51 = sphi 0, %s50
      %s65 = sphi 0, %s51
      %s71 = sphi 0, %s73
      %s74 = sphi 0, %s71
      %s75 = sphi 0, %s74
      %s91 = sphi 0, %s75
    $region4: #{tpu_custom_call.1} parent=1 // loop_header_branch
      %17 = sbr.rel (%p15) target = $region8
    $region5: #{tpu_custom_call.1} parent=1 // loop_body
      %s19 = ssub.s32 %s14, 1
      %s20 = ssub.s32 %s14, 2
      %s21 = sadd.s32 %s14, 1
      %s22 = ssub.s32 %s14, %s21
      %p23 = scmp.eq.s32.totalorder %s22, 0
      %s25 = sadd.s32 %s24, 1
      %s26 = scalar_select %p23, %s24, %s25
      %p29 = pneg %p23
      %p30 = scmp.eq.s32.totalorder %s14, 1
      %p31 = por %p29, %p30
      %p32 = scmp.ne.s32.totalorder %s24, %s27
      %p33 = scmp.eq.s32.totalorder %s14, 0
      %p34 = por %p32, %p33
      %p35 = scmp.ne.s32.totalorder %s24, %s27
      %p36 = scmp.eq.s32.totalorder %s19, 1
      %p37 = por %p35, %p36
      %p38 = scmp.ne.s32.totalorder %s27, %s28
      %p39 = scmp.eq.s32.totalorder %s19, 0
      %p40 = por %p38, %p39
      %p41 = scmp.ne.s32.totalorder %s27, %s28
      %p42 = scmp.eq.s32.totalorder %s20, 1
      %p43 = por %p41, %p42
      %p45 = scmp.ne.s32.totalorder %s28, %s44
      %p46 = scmp.eq.s32.totalorder %s20, 0
      %p47 = por %p45, %p46
      %s49 = sadd.s32 %s48, 1
      %p52 = scmp.eq.s32.totalorder %s14, 1
      %p53 = scmp.ne.s32.totalorder %s48, %s50
      %p54 = scmp.eq.s32.totalorder %s14, 0
      %p55 = por %p53, %p54
      %p56 = scmp.ne.s32.totalorder %s48, %s50
      %p57 = scmp.eq.s32.totalorder %s19, 1
      %p58 = por %p56, %p57
      %p59 = scmp.ne.s32.totalorder %s50, %s51
      %p60 = scmp.eq.s32.totalorder %s19, 0
      %p61 = por %p59, %p60
      %p62 = scmp.ne.s32.totalorder %s50, %s51
      %p63 = scmp.eq.s32.totalorder %s20, 1
      %p64 = por %p62, %p63
      %p66 = scmp.ne.s32.totalorder %s51, %s65
      %p67 = scmp.eq.s32.totalorder %s20, 0
      %p68 = por %p66, %p67
      %s69 = ssub.s32 %s14, %s21
      %p70 = scmp.eq.s32.totalorder %s69, 0
      %s72 = sadd.s32 %s71, 1
      %s73 = scalar_select %p70, %s71, %s72
      %p76 = pneg %p70
      %p77 = scmp.eq.s32.totalorder %s14, 1
      %p78 = por %p76, %p77
      %p79 = scmp.ne.s32.totalorder %s71, %s74
      %p80 = scmp.eq.s32.totalorder %s14, 0
      %p81 = por %p79, %p80
      %p82 = scmp.ne.s32.totalorder %s71, %s74
      %p83 = scmp.eq.s32.totalorder %s19, 1
      %p84 = por %p82, %p83
      %p85 = scmp.ne.s32.totalorder %s74, %s75
      %p86 = scmp.eq.s32.totalorder %s19, 0
      %p87 = por %p85, %p86
      %p88 = scmp.ne.s32.totalorder %s74, %s75
      %p89 = scmp.eq.s32.totalorder %s20, 1
      %p90 = por %p88, %p89
      %p92 = scmp.ne.s32.totalorder %s75, %s91
      %p93 = scmp.eq.s32.totalorder %s20, 0
      %p94 = por %p92, %p93
      %p95 = scmp.le.s32.totalorder 1, %s14
      %p96 = scmp.lt.s32.totalorder %s14, 3
      %p97 = pnand %p95, %p96
      %p98 = pneg %p97
      // Predicated region
      $region9: #{tpu_custom_call.1} parent=5 // pred_check
        _
      $region10: #{tpu_custom_call.1} parent=5 // pred_check_branch
        %100 = sbr.rel (%p97) target = $region12
      $region11: #{tpu_custom_call.1} parent=5 // pred_region
        %s101 = ssub.s32 %s14, 1
        // Predicated region
        $region13: #{tpu_custom_call.1} parent=11 // pred_check
          %p102 = pneg %p61
        $region14: #{tpu_custom_call.1} parent=11 // pred_check_branch
          %104 = sbr.rel (%p102) target = $region16
        $region15: #{tpu_custom_call.1} parent=11 // pred_region
          _
        $region16: #{tpu_custom_call.1} parent=11 // pred_fallthru
          _
      $region12: #{tpu_custom_call.1} parent=5 // pred_fallthru
        _
      %p105 = scmp.lt.s32.totalorder %s14, 2
      // Predicated region
      $region17: #{tpu_custom_call.1} parent=5 // pred_check
        %p106 = pneg %p105
      $region18: #{tpu_custom_call.1} parent=5 // pred_check_branch
        %108 = sbr.rel (%p106) target = $region20
      $region19: #{tpu_custom_call.1} parent=5 // pred_region
        // Predicated region
        $region21: #{tpu_custom_call.1} parent=19 // pred_check
          %p109 = pneg %p34
        $region22: #{tpu_custom_call.1} parent=19 // pred_check_branch
          %111 = sbr.rel (%p109) target = $region24
        $region23: #{tpu_custom_call.1} parent=19 // pred_region
          %s112 = sand.u32 %s24, 1
          %s113 = scalar_lea.sflag [#allocation3], %s112
          %s114 = sand.u32 %s24, 1
          %s115 = smul.addr %s114, 8
          %s116 = scalar_lea.vmem [#allocation2], %s115
          %s118 = ssub.s32 128, 128
          %119 = vsyncadd %s113, %s118
          %s120 = smul.addr %s14, 128
          %s121 = scalar_lea.hbm %s0, %s120
          %s123 = sshll.u32 %s116, 4
          %s124 = int_to_ptr.vmem [resolvable:$true] %s123
          %126 = dma.hbm_to_vmem [thread:$0]  %s121, 128, %s124, %s113
        $region24: #{tpu_custom_call.1} parent=19 // pred_fallthru
          _
      $region20: #{tpu_custom_call.1} parent=5 // pred_fallthru
        _
      %p127 = scmp.le.s32.totalorder 1, %s14
      %p128 = scmp.lt.s32.totalorder %s14, 3
      %p129 = pnand %p127, %p128
      %p130 = pneg %p129
      // Predicated region
      $region25: #{tpu_custom_call.1} parent=5 // pred_check
        _
      $region26: #{tpu_custom_call.1} parent=5 // pred_check_branch
        %132 = sbr.rel (%p129) target = $region28
      $region27: #{tpu_custom_call.1} parent=5 // pred_region
        %s133 = ssub.s32 %s14, 1
        %s134 = sand.u32 %s27, 1
        %s135 = scalar_lea.sflag [#allocation3], %s134
        %s136 = sand.u32 %s27, 1
        %s137 = smul.addr %s136, 8
        %s138 = scalar_lea.vmem [#allocation2], %s137
        // Predicated region
        $region29: #{tpu_custom_call.1} parent=27 // pred_check
          %p139 = pneg %p40
        $region30: #{tpu_custom_call.1} parent=27 // pred_check_branch
          %141 = sbr.rel (%p139) target = $region32
        $region31: #{tpu_custom_call.1} parent=27 // pred_region
          %142 = dma.done %s135, 128
        $region32: #{tpu_custom_call.1} parent=27 // pred_fallthru
          _
        %s143 = sand.u32 %s27, 1
        %s144 = scalar_lea.sflag [#allocation3], %s143
        %s145 = sand.u32 %s27, 1
        %s146 = smul.addr %s145, 8
        %s147 = scalar_lea.vmem [#allocation2], %s146
        %p148 = pneg %p40
        %p149 = pneg %p37
        %p150 = pneg %p61
        %p151 = pneg %p58
        %p152 = pneg %p87
        %p153 = pneg %p84
        %s154 = sand.u32 %s74, 1
        %s155 = scalar_lea.sflag [#allocation4], %s154
        %s156 = sand.u32 %s74, 1
        %s157 = smul.addr %s156, 8
        %s158 = scalar_lea.vmem [#allocation5], %s157
        %v159 = vld [vmem:[%s138] sm:$0xff]
        %v160 = vld [vmem:[%s1] sm:$0x1]
        %v161 = vld [vmem:[%s1 + $0x1] sm:$0x1]
        %vm162 = vcmask 261120
        %v163 = vsel %vm162, %v159, 0.0
        %164 = vadd.xlane.f32.xlu0 %v163
        %v165 = vpop.xlane.xlu0 %164
        %v166 = vrcp.pop 32.0
        %v167 = vmul.f32 %v165, %v166
        %v168 = vsub.f32 %v159, %v167
        %v169 = vmul.f32 %v168, %v168
        %v170 = vsel %vm162, %v169, 0.0
        %171 = vadd.xlane.f32.xlu0 %v170
        %v172 = vpop.xlane.xlu0 %171
        %v173 = vmul.f32 %v172, %v166
        %v174 = vadd.f32 %v173, 1e-06
        %v175 = vrsqrt.pop %v174
        %v176 = vmul.f32 %v168, %v175
        %v177 = vlaneseq
        %v178 = vshrl.u32 %v177, 7
        %v179 = vsub.s32 0, %v178
        %v180 = vrot.slane %v160, %v179
        %v181 = vmul.f32 %v176, %v180
        %v182 = vlaneseq
        %v183 = vshrl.u32 %v182, 7
        %v184 = vsub.s32 0, %v183
        %v185 = vrot.slane %v161, %v184
        %v186 = vadd.f32 %v181, %v185
        %187 = vst.msk [vmem:[%s158] sm:$0xff] %vm162, %v186
        %s188 = sand.u32 %s74, 1
        %s189 = scalar_lea.sflag [#allocation4], %s188
        %s190 = sand.u32 %s74, 1
        %s191 = smul.addr %s190, 8
        %s192 = scalar_lea.vmem [#allocation5], %s191
        // Predicated region
        $region33: #{tpu_custom_call.1} parent=27 // pred_check
          %p193 = pneg %p84
        $region34: #{tpu_custom_call.1} parent=27 // pred_check_branch
          %195 = sbr.rel (%p193) target = $region36
        $region35: #{tpu_custom_call.1} parent=27 // pred_region
          %s197 = ssub.s32 128, 128
          %198 = vsyncadd %s189, %s197
          %s199 = smul.addr %s19, 128
          %s200 = scalar_lea.hbm %s2, %s199
          %s202 = sshll.u32 %s192, 4
          %s203 = int_to_ptr.vmem [resolvable:$true] %s202
          %205 = dma.vmem_to_hbm [thread:$0]  %s203, 128, %s200, %s189
        $region36: #{tpu_custom_call.1} parent=27 // pred_fallthru
          _
      $region28: #{tpu_custom_call.1} parent=5 // pred_fallthru
        _
      %p206 = scmp.le.s32.totalorder 2, %s14
      // Predicated region
      $region37: #{tpu_custom_call.1} parent=5 // pred_check
        %p207 = pneg %p206
      $region38: #{tpu_custom_call.1} parent=5 // pred_check_branch
        %209 = sbr.rel (%p207) target = $region40
      $region39: #{tpu_custom_call.1} parent=5 // pred_region
        %s210 = ssub.s32 %s14, 2
        // Predicated region
        $region41: #{tpu_custom_call.1} parent=39 // pred_check
          %p211 = pneg %p90
        $region42: #{tpu_custom_call.1} parent=39 // pred_check_branch
          %213 = sbr.rel (%p211) target = $region44
        $region43: #{tpu_custom_call.1} parent=39 // pred_region
          %s214 = sand.u32 %s75, 1
          %s215 = scalar_lea.sflag [#allocation4], %s214
          %s216 = sand.u32 %s75, 1
          %s217 = smul.addr %s216, 8
          %s218 = scalar_lea.vmem [#allocation5], %s217
          %219 = dma.done %s215, 128
        $region44: #{tpu_custom_call.1} parent=39 // pred_fallthru
          _
      $region40: #{tpu_custom_call.1} parent=5 // pred_fallthru
        _
    $region6: #{tpu_custom_call.1} parent=1 // loop_footer
      %s18 = sadd.s32 1, %s14
    $region7: #{tpu_custom_call.1} parent=1 // loop_footer_branch
      %13 = sbr.rel target = $region3
    $region8: #{tpu_custom_call.1} parent=1 // loop_exit
      _
    %220 = vsyncpa [#allocation3], 1
    %s221 = scalar_lea.sflag [#allocation3], 1
    %222 = vsyncpa %s221, 1
    %223 = vsyncpa [#allocation4], 1
    %s224 = scalar_lea.sflag [#allocation4], 1
    %225 = vsyncpa %s224, 1

</llo_original>
